<compile_context>
chip_gen: v7x
topology: tpu7x:2x2x1
jax: 0.10.0
libtpu: 0.0.40
codegen_flags: <defaults>
</compile_context>

<pallas_src>
import functools

import jax
import jax.numpy as jnp
from jax.experimental import pallas as pl
from jax.experimental.pallas import tpu as pltpu  # noqa: F401  (kept for TODO below)

EPS = 1e-5


def _instance_norm_seg(v, B, L):
    """InstanceNorm1d over the length axis for batch-folded data.

    v: (C, B*L) with batch folded into lanes. Statistics are computed per
    (channel, batch) over the L-long segment; one-pass mean / E[x^2]
    (biased variance, eps=1e-5, no affine), matching torch defaults.
    """
    C = v.shape[0]
    v3 = v.reshape(C, B, L)
    m = jnp.mean(v3, axis=-1, keepdims=True)
    msq = jnp.mean(v3 * v3, axis=-1, keepdims=True)
    var = jnp.maximum(msq - m * m, 0.0)
    out = (v3 - m) * jax.lax.rsqrt(var + EPS)
    return out.reshape(C, B * L)


def attention_block_kernel(w_ref, wp_ref, gx_ref, o_ref, *, F_int, F_g, B, L):
    # One fused block-diagonal matmul for both 1x1-conv branches:
    #   [[W_g, 0], [0, W_x]] @ [g; x]  ->  [W_g @ g ; W_x @ x]
    # (conv biases omitted: exactly cancelled by the following InstanceNorm).
    h_all = jnp.dot(w_ref[...], gx_ref[...],
                    preferred_element_type=jnp.float32)        # (2*F_int, B*L)

    # Single fused InstanceNorm over both branches (row-wise, so equivalent to
    # normalizing each branch separately), then additive combine + ReLU.
    hn = _instance_norm_seg(h_all, B, L)                       # (2*F_int, B*L)
    h = jnp.maximum(hn[:F_int, :] + hn[F_int:, :], 0.0)        # (F_int, B*L)

    # psi projection (F_int -> 1): VPU multiply + sublane reduce (no M=1 matmul).
    q = jnp.sum(wp_ref[...] * h, axis=0, keepdims=True)        # (1, B*L)
    q = _instance_norm_seg(q, B, L)
    psi = jax.nn.sigmoid(q)

    # x_hat = alpha * x ; the x slab is the last F_x rows of gx (static slice,
    # sublane-aligned), so no second copy of x is DMA'd.
    x = gx_ref[F_g:, :]                                        # (F_x, B*L)
    o_ref[...] = (x * psi).astype(o_ref.dtype)


def attention_block(g, x, params):
    """g: (B, F_g, L), x: (B, F_x, L)  ->  (B, F_x, L)."""
    B, F_g, L = g.shape
    _, F_x, _ = x.shape
    W_g, b_g, W_x, b_x, W_psi, b_psi = params
    del b_g, b_x, b_psi  # mathematically cancelled by InstanceNorm (mean subtraction)
    F_int = W_g.shape[0]

    # Block-diagonal weight merging W_g and W_x into a single MXU matmul.
    W_blk = jnp.zeros((2 * F_int, F_g + F_x), W_g.dtype)
    W_blk = W_blk.at[:F_int, :F_g].set(W_g)
    W_blk = W_blk.at[F_int:, F_g:].set(W_x)
    wp_col = W_psi.reshape(F_int, 1)                           # psi weights as column

    # Fold batch into the lane axis: (B, C, L) -> (C, B*L) lane-dense slabs.
    gx = jnp.concatenate([g, x], axis=1)                       # (B, F_g+F_x, L)
    gx2 = jnp.transpose(gx, (1, 0, 2)).reshape(F_g + F_x, B * L)

    kernel = functools.partial(attention_block_kernel,
                               F_int=F_int, F_g=F_g, B=B, L=L)

    # Single invocation: all operands live whole in VMEM at these sizes.
    # TODO(synk): for very large B*L (especially v7x's 64 MiB VMEM), tile the
    # batch over a grid axis and/or raise vmem_limit_bytes via pltpu.CompilerParams.
    out2 = pl.pallas_call(
        kernel,
        out_shape=jax.ShapeDtypeStruct((F_x, B * L), x.dtype),
    )(W_blk, wp_col, gx2)

    return jnp.transpose(out2.reshape(F_x, B, L), (1, 0, 2))


def init_params(key, F_x, F_g, F_int):
    ks = jax.random.split(key, 6)
    # Deterministic synthetic init (shapes match nn.Conv1d(k=1) weights squeezed).
    W_g = jax.random.normal(ks[0], (F_int, F_g), jnp.float32) * 0.2
    b_g = jax.random.normal(ks[1], (F_int, 1), jnp.float32) * 0.1
    W_x = jax.random.normal(ks[2], (F_int, F_x), jnp.float32) * 0.2
    b_x = jax.random.normal(ks[3], (F_int, 1), jnp.float32) * 0.1
    W_psi = jax.random.normal(ks[4], (1, F_int), jnp.float32) * 0.2
    b_psi = jax.random.normal(ks[5], (1, 1), jnp.float32) * 0.1
    return (W_g, b_g, W_x, b_x, W_psi, b_psi)


def _instance_norm_ref(v):
    m = jnp.mean(v, axis=-1, keepdims=True)
    var = jnp.mean((v - m) ** 2, axis=-1, keepdims=True)
    return (v - m) * jax.lax.rsqrt(var + EPS)


def attention_block_ref(g, x, params):
    """Pure-JAX reference mirroring the PyTorch forward (biases included)."""
    W_g, b_g, W_x, b_x, W_psi, b_psi = params
    g1 = _instance_norm_ref(jnp.einsum("oc,bcl->bol", W_g, g) + b_g[None])
    x1 = _instance_norm_ref(jnp.einsum("oc,bcl->bol", W_x, x) + b_x[None])
    h = jnp.maximum(g1 + x1, 0.0)
    q = _instance_norm_ref(jnp.einsum("oc,bcl->bol", W_psi, h) + b_psi[None])
    return x * jax.nn.sigmoid(q)


if __name__ == "__main__":
    B, F_x, F_g, F_int, L = 2, 4, 8, 16, 128

    key = jax.random.PRNGKey(0)
    kp, kg, kx = jax.random.split(key, 3)
    params = init_params(kp, F_x, F_g, F_int)
    g = jax.random.normal(kg, (B, F_g, L), jnp.float32)
    x = jax.random.normal(kx, (B, F_x, L), jnp.float32)

    out = attention_block(g, x, params)
    out = jax.block_until_ready(out)

    ref = attention_block_ref(g, x, params)
    assert out.shape == (B, F_x, L)
    # Kernel drops the (norm-cancelled) biases and uses one-pass variance, so
    # allow tiny fp differences vs the literal PyTorch-style reference.
    assert jnp.allclose(out, ref, atol=1e-4, rtol=1e-4), float(
        jnp.max(jnp.abs(out - ref)))

    print("KERNEL_OK")
</pallas_src>

<mosaic_0001>
module attributes {stable_mosaic.version = 11 : i64} {
  func.func @attention_block_kernel(%arg0: memref<32x12xf32, #tpu.memory_space<vmem>>, %arg1: memref<16x1xf32, #tpu.memory_space<vmem>>, %arg2: memref<12x256xf32, #tpu.memory_space<vmem>>, %arg3: memref<4x256xf32, #tpu.memory_space<vmem>>) attributes {dimension_semantics = [], scalar_prefetch = 0 : i64, scratch_operands = 0 : i64, tpu.core_type = #tpu.core_type<tc>} {
    %c0 = arith.constant 0 : index
    %c0_0 = arith.constant 0 : index
    %0 = vector.load %arg0[%c0, %c0_0] : memref<32x12xf32, #tpu.memory_space<vmem>>, vector<32x12xf32>
    %c0_1 = arith.constant 0 : index
    %c0_2 = arith.constant 0 : index
    %1 = vector.load %arg2[%c0_1, %c0_2] : memref<12x256xf32, #tpu.memory_space<vmem>>, vector<12x256xf32>
    %cst = arith.constant dense<0.000000e+00> : vector<32x256xf32>
    %2 = tpu.matmul %0, %1, %cst {dimension_numbers = #tpu.dot_dimension_numbers<[1], [0], [0], [1], [0, 0, 1, 1], [], []>} : vector<32x12xf32>, vector<12x256xf32>, vector<32x256xf32> -> vector<32x256xf32>
    %3 = vector.shape_cast %2 : vector<32x256xf32> to vector<32x2x128xf32>
    %cst_3 = arith.constant dense<0.000000e+00> : vector<32x2xf32>
    %4 = vector.multi_reduction <add>, %3, %cst_3 [2] : vector<32x2x128xf32> to vector<32x2xf32>
    %5 = vector.shape_cast %4 : vector<32x2xf32> to vector<32x2x1xf32>
    %cst_4 = arith.constant 1.280000e+02 : f32
    %6 = vector.broadcast %cst_4 : f32 to vector<32x2x1xf32>
    %7 = arith.divf %5, %6 : vector<32x2x1xf32>
    %8 = arith.mulf %3, %3 : vector<32x2x128xf32>
    %cst_5 = arith.constant dense<0.000000e+00> : vector<32x2xf32>
    %9 = vector.multi_reduction <add>, %8, %cst_5 [2] : vector<32x2x128xf32> to vector<32x2xf32>
    %10 = vector.shape_cast %9 : vector<32x2xf32> to vector<32x2x1xf32>
    %cst_6 = arith.constant 1.280000e+02 : f32
    %11 = vector.broadcast %cst_6 : f32 to vector<32x2x1xf32>
    %12 = arith.divf %10, %11 : vector<32x2x1xf32>
    %13 = arith.mulf %7, %7 : vector<32x2x1xf32>
    %14 = arith.subf %12, %13 : vector<32x2x1xf32>
    %cst_7 = arith.constant 0.000000e+00 : f32
    %15 = vector.broadcast %cst_7 : f32 to vector<32x2x1xf32>
    %16 = arith.maximumf %14, %15 : vector<32x2x1xf32>
    %17 = vector.broadcast %7 : vector<32x2x1xf32> to vector<32x2x128xf32>
    %18 = arith.subf %3, %17 : vector<32x2x128xf32>
    %cst_8 = arith.constant 9.99999974E-6 : f32
    %19 = vector.broadcast %cst_8 : f32 to vector<32x2x1xf32>
    %20 = arith.addf %16, %19 : vector<32x2x1xf32>
    %21 = math.rsqrt %20 : vector<32x2x1xf32>
    %22 = vector.broadcast %21 : vector<32x2x1xf32> to vector<32x2x128xf32>
    %23 = arith.mulf %18, %22 : vector<32x2x128xf32>
    %24 = vector.shape_cast %23 : vector<32x2x128xf32> to vector<32x256xf32>
    %25 = vector.extract_strided_slice %24 {offsets = [0, 0], sizes = [16, 256], strides = [1, 1]} : vector<32x256xf32> to vector<16x256xf32>
    %26 = vector.extract_strided_slice %24 {offsets = [16, 0], sizes = [16, 256], strides = [1, 1]} : vector<32x256xf32> to vector<16x256xf32>
    %27 = arith.addf %25, %26 : vector<16x256xf32>
    %cst_9 = arith.constant 0.000000e+00 : f32
    %28 = vector.broadcast %cst_9 : f32 to vector<16x256xf32>
    %29 = arith.maximumf %27, %28 : vector<16x256xf32>
    %c0_10 = arith.constant 0 : index
    %c0_11 = arith.constant 0 : index
    %30 = vector.load %arg1[%c0_10, %c0_11] : memref<16x1xf32, #tpu.memory_space<vmem>>, vector<16x1xf32>
    %31 = vector.broadcast %30 : vector<16x1xf32> to vector<16x256xf32>
    %32 = arith.mulf %31, %29 : vector<16x256xf32>
    %cst_12 = arith.constant dense<0.000000e+00> : vector<256xf32>
    %33 = vector.multi_reduction <add>, %32, %cst_12 [0] : vector<16x256xf32> to vector<256xf32>
    %34 = vector.shape_cast %33 : vector<256xf32> to vector<1x256xf32>
    %35 = vector.shape_cast %34 : vector<1x256xf32> to vector<1x2x128xf32>
    %cst_13 = arith.constant dense<0.000000e+00> : vector<1x2xf32>
    %36 = vector.multi_reduction <add>, %35, %cst_13 [2] : vector<1x2x128xf32> to vector<1x2xf32>
    %37 = vector.shape_cast %36 : vector<1x2xf32> to vector<1x2x1xf32>
    %cst_14 = arith.constant 1.280000e+02 : f32
    %38 = vector.broadcast %cst_14 : f32 to vector<1x2x1xf32>
    %39 = arith.divf %37, %38 : vector<1x2x1xf32>
    %40 = arith.mulf %35, %35 : vector<1x2x128xf32>
    %cst_15 = arith.constant dense<0.000000e+00> : vector<1x2xf32>
    %41 = vector.multi_reduction <add>, %40, %cst_15 [2] : vector<1x2x128xf32> to vector<1x2xf32>
    %42 = vector.shape_cast %41 : vector<1x2xf32> to vector<1x2x1xf32>
    %cst_16 = arith.constant 1.280000e+02 : f32
    %43 = vector.broadcast %cst_16 : f32 to vector<1x2x1xf32>
    %44 = arith.divf %42, %43 : vector<1x2x1xf32>
    %45 = arith.mulf %39, %39 : vector<1x2x1xf32>
    %46 = arith.subf %44, %45 : vector<1x2x1xf32>
    %cst_17 = arith.constant 0.000000e+00 : f32
    %47 = vector.broadcast %cst_17 : f32 to vector<1x2x1xf32>
    %48 = arith.maximumf %46, %47 : vector<1x2x1xf32>
    %49 = vector.broadcast %39 : vector<1x2x1xf32> to vector<1x2x128xf32>
    %50 = arith.subf %35, %49 : vector<1x2x128xf32>
    %cst_18 = arith.constant 9.99999974E-6 : f32
    %51 = vector.broadcast %cst_18 : f32 to vector<1x2x1xf32>
    %52 = arith.addf %48, %51 : vector<1x2x1xf32>
    %53 = math.rsqrt %52 : vector<1x2x1xf32>
    %54 = vector.broadcast %53 : vector<1x2x1xf32> to vector<1x2x128xf32>
    %55 = arith.mulf %50, %54 : vector<1x2x128xf32>
    %56 = vector.shape_cast %55 : vector<1x2x128xf32> to vector<1x256xf32>
    %57 = arith.negf %56 : vector<1x256xf32>
    %58 = math.exp %57 : vector<1x256xf32>
    %cst_19 = arith.constant 1.000000e+00 : f32
    %59 = vector.broadcast %cst_19 : f32 to vector<1x256xf32>
    %60 = arith.addf %59, %58 : vector<1x256xf32>
    %61 = arith.divf %59, %60 : vector<1x256xf32>
    %c8 = arith.constant 8 : index
    %c0_20 = arith.constant 0 : index
    %62 = vector.load %arg2[%c8, %c0_20] : memref<12x256xf32, #tpu.memory_space<vmem>>, vector<4x256xf32>
    %63 = vector.broadcast %61 : vector<1x256xf32> to vector<4x256xf32>
    %64 = arith.mulf %62, %63 : vector<4x256xf32>
    %c0_21 = arith.constant 0 : index
    %c0_22 = arith.constant 0 : index
    %65 = vector.load %arg3[%c0_21, %c0_22] : memref<4x256xf32, #tpu.memory_space<vmem>>, vector<4x256xf32>
    tpu.vector_store %arg3[%c0_21, %c0_22], %64 {strides = array<i32>} : memref<4x256xf32, #tpu.memory_space<vmem>>, vector<4x256xf32>,
    return
  }
}

</mosaic_0001>

<llo_original>
// kernel: tpu_custom_call.1
$region0: #{tpu_custom_call.1}
  #allocation0 [shape = 'u32[]', space=smem, size = 0x4, offset = 0x4, fixed_abs, tag = 'smem constant byte address 0x4 - core index']
  #allocation1 [shape = 'u32[144,128]{1,0:T(1,128)}', space=vmem, size = 0x12000, scoped, tag = 'internal scratch']
  %s0 = inlined_call_operand.vmem [shape: f32[32,12], index: 0, kind: input, shape index: {}]
  %s1 = inlined_call_operand.vmem [shape: f32[16,1], index: 1, kind: input, shape index: {}]
  %s2 = inlined_call_operand.vmem [shape: f32[12,256], index: 2, kind: input, shape index: {}]
  %s3 = inlined_call_operand.hbm [shape: f32[4,256], index: 3, kind: output, shape index: {}]
  %s4 = sld [smem:[#allocation0]]
  $region22: #{tpu_custom_call.1} parent=0
    _
  %s6 = ssub.s32 1, %s4
  %s7 = scalar_select 0, %s6, %s4
  $region1: #{tpu_custom_call.1} parent=0
    #allocation2 [shape = 'u8[4096]{0}', space=vmem, size = 0x1000, scoped, tag = 'output window, operand 0, single buffered']
    #allocation3 [shape = 's32[1]{0}', space=sflag, size = 0x4, scoped, tag = 'scoped memory for tpu_custom_call.1']
    %8 = vsyncpa [#allocation3], 0
    // Predicated region
    $region2: #{tpu_custom_call.1} parent=1 // pred_check
      _
    $region3: #{tpu_custom_call.1} parent=1 // pred_check_branch
      %10 = sbr.rel (0) target = $region5
    $region4: #{tpu_custom_call.1} parent=1 // pred_region
      _
    $region5: #{tpu_custom_call.1} parent=1 // pred_fallthru
      _
    // Predicated region
    $region6: #{tpu_custom_call.1} parent=1 // pred_check
      _
    $region7: #{tpu_custom_call.1} parent=1 // pred_check_branch
      %12 = sbr.rel (0) target = $region9
    $region8: #{tpu_custom_call.1} parent=1 // pred_region
      _
    $region9: #{tpu_custom_call.1} parent=1 // pred_fallthru
      _
    // Predicated region
    $region10: #{tpu_custom_call.1} parent=1 // pred_check
      _
    $region11: #{tpu_custom_call.1} parent=1 // pred_check_branch
      %14 = sbr.rel (0) target = $region13
    $region12: #{tpu_custom_call.1} parent=1 // pred_region
      _
    $region13: #{tpu_custom_call.1} parent=1 // pred_fallthru
      _
    %v15 = vld [vmem:[%s0] sm:$0xff]
    %v16 = vld [vmem:[%s0 + $0x8] sm:$0xff]
    %v17 = vld [vmem:[%s0 + $0x10] sm:$0xff]
    %v18 = vld [vmem:[%s0 + $0x18] sm:$0xff]
    %v19 = vld [vmem:[%s2] sm:$0xff]
    %v20 = vld [vmem:[%s2 + $0x8] sm:$0xff]
    %v21 = vld [vmem:[%s2 + $0x10] sm:$0xf]
    %v22 = vld [vmem:[%s2 + $0x18] sm:$0xf]
    %vm23 = vcmask 97280
    %v25 = vsel %vm23, %v15, 0
    %v28 = vsel %vm23, %v16, 0
    %v31 = vsel %vm23, %v17, 0
    %v34 = vsel %vm23, %v18, 0
    %vm36 = vcmask 1043456
    %v38 = vsel %vm36, %v21, 0
    %v41 = vsel %vm36, %v22, 0
    %43 = vmatprep.subr.mxu0 %v20
    %44 = vmatpush1.msra.mxu0 %v19
    %45 = vmatprep.subr.mxu0 %v41
    %46 = vmatpush1.msra.mxu0 %v38
    %47 = vmatprep.subr.mxu0 0.0
    %48 = vmatpush1.msra.mxu0 0.0
    %49 = vmatprep.subr.mxu0 0.0
    %50 = vmatpush1.msra.mxu0 0.0
    %51 = vmatprep.subr.mxu0 0.0
    %52 = vmatpush1.msra.mxu0 0.0
    %53 = vmatprep.subr.mxu0 0.0
    %54 = vmatpush1.msra.mxu0 0.0
    %55 = vmatprep.subr.mxu0 0.0
    %56 = vmatpush1.msra.mxu0 0.0
    %57 = vmatprep.subr.mxu0 0.0
    %58 = vmatpush1.msra.mxu0 0.0
    %59 = vmatprep.subr.mxu0 0.0
    %60 = vmatpush1.msra.mxu0 0.0
    %61 = vmatprep.subr.mxu0 0.0
    %62 = vmatpush1.msra.mxu0 0.0
    %63 = vmatprep.subr.mxu0 0.0
    %64 = vmatpush1.msra.mxu0 0.0
    %65 = vmatprep.subr.mxu0 0.0
    %66 = vmatpush1.msra.mxu0 0.0
    %67 = vmatprep.subr.mxu0 0.0
    %68 = vmatpush1.msra.mxu0 0.0
    %69 = vmatprep.subr.mxu0 0.0
    %70 = vmatpush1.msra.mxu0 0.0
    %71 = vmatprep.subr.mxu0 0.0
    %72 = vmatpush1.msra.mxu0 0.0
    %73 = vmatprep.subr.mxu0 0.0
    %74 = vmatpush1.msra.mxu0 0.0
    %75 = vmatprep.subr.mxu0 0.0
    %76 = vmatpush1.msra.mxu0 0.0
    %77 = vmatprep.subr.mxu0 0.0
    %78 = vmatpush1.msra.mxu0 0.0
    %79 = vmatprep.subr.mxu0 0.0
    %80 = vmatpush1.msra.mxu0 0.0
    %81 = vmatprep.subr.mxu0 0.0
    %82 = vmatpush1.msra.mxu0 0.0
    %83 = vmatprep.subr.mxu0 0.0
    %84 = vmatpush1.msra.mxu0 0.0
    %85 = vmatprep.subr.mxu0 0.0
    %86 = vmatpush1.msra.mxu0 0.0
    %87 = vmatprep.subr.mxu0 0.0
    %88 = vmatpush1.msra.mxu0 0.0
    %89 = vmatprep.subr.mxu0 0.0
    %90 = vmatpush1.msra.mxu0 0.0
    %91 = vmatprep.subr.mxu0 0.0
    %92 = vmatpush1.msra.mxu0 0.0
    %93 = vmatprep.subr.mxu0 0.0
    %94 = vmatpush1.msra.mxu0 0.0
    %95 = vmatprep.subr.mxu0 0.0
    %96 = vmatpush1.msra.mxu0 0.0
    %97 = vmatprep.subr.mxu0 0.0
    %98 = vmatpush1.msra.mxu0 0.0
    %99 = vmatprep.subr.mxu0 0.0
    %100 = vmatpush1.msra.mxu0 0.0
    %101 = vmatprep.subr.mxu0 0.0
    %102 = vmatpush1.msra.mxu0 0.0
    %103 = vmatprep.subr.mxu0 0.0
    %104 = vmatpush1.msra.mxu0 0.0
    %105 = vmatprep.subr.mxu0 0.0
    %106 = vmatpush1.msra.mxu0 0.0
    %107 = vmatprep.mubr.f32.mxu0 0.0
    %108 = vmatmul.mubr.f32.gmra.mrb[0].mxu0 %v25
    %v109 = vpop.f32.mrb[0].mxu0
    %v110 = vadd.f32 0.0, %v109
    %v111 = vpop.f32.mrb[0].mxu0
    %v112 = vadd.f32 0.0, %v111
    %113 = vmatprep.mubr.f32.mxu0 0.0
    %114 = vmatmul.mubr.f32.gmra.mrb[0].mxu0 %v28
    %v115 = vpop.f32.mrb[0].mxu0
    %v116 = vadd.f32 0.0, %v115
    %v117 = vpop.f32.mrb[0].mxu0
    %v118 = vadd.f32 0.0, %v117
    %119 = vmatprep.mubr.f32.mxu0 0.0
    %120 = vmatmul.mubr.f32.gmra.mrb[0].mxu0 %v31
    %v121 = vpop.f32.mrb[0].mxu0
    %v122 = vadd.f32 0.0, %v121
    %v123 = vpop.f32.mrb[0].mxu0
    %v124 = vadd.f32 0.0, %v123
    %125 = vmatprep.mubr.f32.mxu0 0.0
    %126 = vmatmul.mubr.f32.gmra.mrb[0].mxu0 %v34
    %v127 = vpop.f32.mrb[0].mxu0
    %v128 = vadd.f32 0.0, %v127
    %v129 = vpop.f32.mrb[0].mxu0
    %v130 = vadd.f32 0.0, %v129
    %131 = vdwg.mxu0
    %v132 = vcombine.high %v110, 0.0
    %v134 = vunpack.c.l.s4 1983009808
    %v135 = vunpack.c.0.s8 %v134
    %v136 = vlaneseq
    %v137 = vshrl.u32 %v136, 7
    %v138 = vsub.s32 %v135, %v137
    %v139 = vrot.slane %v110, %v138
    %v141 = vunpack.c.l.s4 1983009808
    %v142 = vunpack.c.0.s8 %v141
    %v143 = vlaneseq
    %v144 = vshrl.u32 %v143, 7
    %v145 = vsub.s32 %v142, %v144
    %v146 = vrot.slane %v132, %v145
    %v147 = vcombine.high %v112, 0.0
    %v149 = vunpack.c.l.s4 1983009808
    %v150 = vunpack.c.0.s8 %v149
    %v151 = vlaneseq
    %v152 = vshrl.u32 %v151, 7
    %v153 = vsub.s32 %v150, %v152
    %v154 = vrot.slane %v112, %v153
    %v156 = vunpack.c.l.s4 1983009808
    %v157 = vunpack.c.0.s8 %v156
    %v158 = vlaneseq
    %v159 = vshrl.u32 %v158, 7
    %v160 = vsub.s32 %v157, %v159
    %v161 = vrot.slane %v147, %v160
    %v162 = vcombine.low %v139, %v154
    %v163 = vcombine.high %v139, %v154
    %v165 = vunpack.c.l.s4 1934713408
    %v166 = vunpack.c.0.s8 %v165
    %v167 = vlaneseq
    %v168 = vshrl.u32 %v167, 7
    %v169 = vsub.s32 %v166, %v168
    %v170 = vrot.slane %v162, %v169
    %v172 = vunpack.c.l.s4 1934713408
    %v173 = vunpack.c.0.s8 %v172
    %v174 = vlaneseq
    %v175 = vshrl.u32 %v174, 7
    %v176 = vsub.s32 %v173, %v175
    %v177 = vrot.slane %v163, %v176
    %v178 = vcombine.low %v146, %v161
    %v179 = vcombine.high %v146, %v161
    %v181 = vunpack.c.l.s4 1934713408
    %v182 = vunpack.c.0.s8 %v181
    %v183 = vlaneseq
    %v184 = vshrl.u32 %v183, 7
    %v185 = vsub.s32 %v182, %v184
    %v186 = vrot.slane %v178, %v185
    %v188 = vunpack.c.l.s4 1934713408
    %v189 = vunpack.c.0.s8 %v188
    %v190 = vlaneseq
    %v191 = vshrl.u32 %v190, 7
    %v192 = vsub.s32 %v189, %v191
    %v193 = vrot.slane %v179, %v192
    %v194 = vcombine.high %v170, 0.0
    %v195 = vcombine.high %v177, 0.0
    %v196 = vcombine.high %v186, 0.0
    %v197 = vcombine.high %v193, 0.0
    %v198 = vcombine.high %v116, 0.0
    %v200 = vunpack.c.l.s4 1983009808
    %v201 = vunpack.c.0.s8 %v200
    %v202 = vlaneseq
    %v203 = vshrl.u32 %v202, 7
    %v204 = vsub.s32 %v201, %v203
    %v205 = vrot.slane %v116, %v204
    %v207 = vunpack.c.l.s4 1983009808
    %v208 = vunpack.c.0.s8 %v207
    %v209 = vlaneseq
    %v210 = vshrl.u32 %v209, 7
    %v211 = vsub.s32 %v208, %v210
    %v212 = vrot.slane %v198, %v211
    %v213 = vcombine.high %v118, 0.0
    %v215 = vunpack.c.l.s4 1983009808
    %v216 = vunpack.c.0.s8 %v215
    %v217 = vlaneseq
    %v218 = vshrl.u32 %v217, 7
    %v219 = vsub.s32 %v216, %v218
    %v220 = vrot.slane %v118, %v219
    %v222 = vunpack.c.l.s4 1983009808
    %v223 = vunpack.c.0.s8 %v222
    %v224 = vlaneseq
    %v225 = vshrl.u32 %v224, 7
    %v226 = vsub.s32 %v223, %v225
    %v227 = vrot.slane %v213, %v226
    %v228 = vcombine.low %v205, %v220
    %v229 = vcombine.high %v205, %v220
    %v231 = vunpack.c.l.s4 1934713408
    %v232 = vunpack.c.0.s8 %v231
    %v233 = vlaneseq
    %v234 = vshrl.u32 %v233, 7
    %v235 = vsub.s32 %v232, %v234
    %v236 = vrot.slane %v228, %v235
    %v238 = vunpack.c.l.s4 1934713408
    %v239 = vunpack.c.0.s8 %v238
    %v240 = vlaneseq
    %v241 = vshrl.u32 %v240, 7
    %v242 = vsub.s32 %v239, %v241
    %v243 = vrot.slane %v229, %v242
    %v244 = vcombine.low %v212, %v227
    %v245 = vcombine.high %v212, %v227
    %v247 = vunpack.c.l.s4 1934713408
    %v248 = vunpack.c.0.s8 %v247
    %v249 = vlaneseq
    %v250 = vshrl.u32 %v249, 7
    %v251 = vsub.s32 %v248, %v250
    %v252 = vrot.slane %v244, %v251
    %v254 = vunpack.c.l.s4 1934713408
    %v255 = vunpack.c.0.s8 %v254
    %v256 = vlaneseq
    %v257 = vshrl.u32 %v256, 7
    %v258 = vsub.s32 %v255, %v257
    %v259 = vrot.slane %v245, %v258
    %v260 = vcombine.high %v236, 0.0
    %v261 = vcombine.high %v243, 0.0
    %v262 = vcombine.high %v252, 0.0
    %v263 = vcombine.high %v259, 0.0
    %v264 = vcombine.high %v122, 0.0
    %v266 = vunpack.c.l.s4 1983009808
    %v267 = vunpack.c.0.s8 %v266
    %v268 = vlaneseq
    %v269 = vshrl.u32 %v268, 7
    %v270 = vsub.s32 %v267, %v269
    %v271 = vrot.slane %v122, %v270
    %v273 = vunpack.c.l.s4 1983009808
    %v274 = vunpack.c.0.s8 %v273
    %v275 = vlaneseq
    %v276 = vshrl.u32 %v275, 7
    %v277 = vsub.s32 %v274, %v276
    %v278 = vrot.slane %v264, %v277
    %v279 = vcombine.high %v124, 0.0
    %v281 = vunpack.c.l.s4 1983009808
    %v282 = vunpack.c.0.s8 %v281
    %v283 = vlaneseq
    %v284 = vshrl.u32 %v283, 7
    %v285 = vsub.s32 %v282, %v284
    %v286 = vrot.slane %v124, %v285
    %v288 = vunpack.c.l.s4 1983009808
    %v289 = vunpack.c.0.s8 %v288
    %v290 = vlaneseq
    %v291 = vshrl.u32 %v290, 7
    %v292 = vsub.s32 %v289, %v291
    %v293 = vrot.slane %v279, %v292
    %v294 = vcombine.low %v271, %v286
    %v295 = vcombine.high %v271, %v286
    %v297 = vunpack.c.l.s4 1934713408
    %v298 = vunpack.c.0.s8 %v297
    %v299 = vlaneseq
    %v300 = vshrl.u32 %v299, 7
    %v301 = vsub.s32 %v298, %v300
    %v302 = vrot.slane %v294, %v301
    %v304 = vunpack.c.l.s4 1934713408
    %v305 = vunpack.c.0.s8 %v304
    %v306 = vlaneseq
    %v307 = vshrl.u32 %v306, 7
    %v308 = vsub.s32 %v305, %v307
    %v309 = vrot.slane %v295, %v308
    %v310 = vcombine.low %v278, %v293
    %v311 = vcombine.high %v278, %v293
    %v313 = vunpack.c.l.s4 1934713408
    %v314 = vunpack.c.0.s8 %v313
    %v315 = vlaneseq
    %v316 = vshrl.u32 %v315, 7
    %v317 = vsub.s32 %v314, %v316
    %v318 = vrot.slane %v310, %v317
    %v320 = vunpack.c.l.s4 1934713408
    %v321 = vunpack.c.0.s8 %v320
    %v322 = vlaneseq
    %v323 = vshrl.u32 %v322, 7
    %v324 = vsub.s32 %v321, %v323
    %v325 = vrot.slane %v311, %v324
    %v326 = vcombine.high %v302, 0.0
    %v327 = vcombine.high %v309, 0.0
    %v328 = vcombine.high %v318, 0.0
    %v329 = vcombine.high %v325, 0.0
    %v330 = vcombine.high %v128, 0.0
    %v332 = vunpack.c.l.s4 1983009808
    %v333 = vunpack.c.0.s8 %v332
    %v334 = vlaneseq
    %v335 = vshrl.u32 %v334, 7
    %v336 = vsub.s32 %v333, %v335
    %v337 = vrot.slane %v128, %v336
    %v339 = vunpack.c.l.s4 1983009808
    %v340 = vunpack.c.0.s8 %v339
    %v341 = vlaneseq
    %v342 = vshrl.u32 %v341, 7
    %v343 = vsub.s32 %v340, %v342
    %v344 = vrot.slane %v330, %v343
    %v345 = vcombine.high %v130, 0.0
    %v347 = vunpack.c.l.s4 1983009808
    %v348 = vunpack.c.0.s8 %v347
    %v349 = vlaneseq
    %v350 = vshrl.u32 %v349, 7
    %v351 = vsub.s32 %v348, %v350
    %v352 = vrot.slane %v130, %v351
    %v354 = vunpack.c.l.s4 1983009808
    %v355 = vunpack.c.0.s8 %v354
    %v356 = vlaneseq
    %v357 = vshrl.u32 %v356, 7
    %v358 = vsub.s32 %v355, %v357
    %v359 = vrot.slane %v345, %v358
    %v360 = vcombine.low %v337, %v352
    %v361 = vcombine.high %v337, %v352
    %v363 = vunpack.c.l.s4 1934713408
    %v364 = vunpack.c.0.s8 %v363
    %v365 = vlaneseq
    %v366 = vshrl.u32 %v365, 7
    %v367 = vsub.s32 %v364, %v366
    %v368 = vrot.slane %v360, %v367
    %v370 = vunpack.c.l.s4 1934713408
    %v371 = vunpack.c.0.s8 %v370
    %v372 = vlaneseq
    %v373 = vshrl.u32 %v372, 7
    %v374 = vsub.s32 %v371, %v373
    %v375 = vrot.slane %v361, %v374
    %v376 = vcombine.low %v344, %v359
    %v377 = vcombine.high %v344, %v359
    %v379 = vunpack.c.l.s4 1934713408
    %v380 = vunpack.c.0.s8 %v379
    %v381 = vlaneseq
    %v382 = vshrl.u32 %v381, 7
    %v383 = vsub.s32 %v380, %v382
    %v384 = vrot.slane %v376, %v383
    %v386 = vunpack.c.l.s4 1934713408
    %v387 = vunpack.c.0.s8 %v386
    %v388 = vlaneseq
    %v389 = vshrl.u32 %v388, 7
    %v390 = vsub.s32 %v387, %v389
    %v391 = vrot.slane %v377, %v390
    %v392 = vcombine.high %v368, 0.0
    %v393 = vcombine.high %v375, 0.0
    %v394 = vcombine.high %v384, 0.0
    %v395 = vcombine.high %v391, 0.0
    %vm396 = vcmask 1041408
    %v397 = vsel %vm396, %v170, 0.0
    %398 = vadd.xlane.f32.xlu0 %v397
    %v399 = vpop.xlane.xlu0 %398
    %v400 = vsel %vm396, %v194, 0.0
    %401 = vadd.xlane.f32.xlu0 %v400
    %v402 = vpop.xlane.xlu0 %401
    %v403 = vsel %vm396, %v177, 0.0
    %404 = vadd.xlane.f32.xlu0 %v403
    %v405 = vpop.xlane.xlu0 %404
    %v406 = vsel %vm396, %v195, 0.0
    %407 = vadd.xlane.f32.xlu0 %v406
    %v408 = vpop.xlane.xlu0 %407
    %v409 = vsel %vm396, %v186, 0.0
    %410 = vadd.xlane.f32.xlu0 %v409
    %v411 = vpop.xlane.xlu0 %410
    %v412 = vsel %vm396, %v196, 0.0
    %413 = vadd.xlane.f32.xlu0 %v412
    %v414 = vpop.xlane.xlu0 %413
    %v415 = vsel %vm396, %v193, 0.0
    %416 = vadd.xlane.f32.xlu0 %v415
    %v417 = vpop.xlane.xlu0 %416
    %v418 = vsel %vm396, %v197, 0.0
    %419 = vadd.xlane.f32.xlu0 %v418
    %v420 = vpop.xlane.xlu0 %419
    %v421 = vsel %vm396, %v236, 0.0
    %422 = vadd.xlane.f32.xlu0 %v421
    %v423 = vpop.xlane.xlu0 %422
    %v424 = vsel %vm396, %v260, 0.0
    %425 = vadd.xlane.f32.xlu0 %v424
    %v426 = vpop.xlane.xlu0 %425
    %v427 = vsel %vm396, %v243, 0.0
    %428 = vadd.xlane.f32.xlu0 %v427
    %v429 = vpop.xlane.xlu0 %428
    %v430 = vsel %vm396, %v261, 0.0
    %431 = vadd.xlane.f32.xlu0 %v430
    %v432 = vpop.xlane.xlu0 %431
    %v433 = vsel %vm396, %v252, 0.0
    %434 = vadd.xlane.f32.xlu0 %v433
    %v435 = vpop.xlane.xlu0 %434
    %v436 = vsel %vm396, %v262, 0.0
    %437 = vadd.xlane.f32.xlu0 %v436
    %v438 = vpop.xlane.xlu0 %437
    %v439 = vsel %vm396, %v259, 0.0
    %440 = vadd.xlane.f32.xlu0 %v439
    %v441 = vpop.xlane.xlu0 %440
    %v442 = vsel %vm396, %v263, 0.0
    %443 = vadd.xlane.f32.xlu0 %v442
    %v444 = vpop.xlane.xlu0 %443
    %v445 = vsel %vm396, %v302, 0.0
    %446 = vadd.xlane.f32.xlu0 %v445
    %v447 = vpop.xlane.xlu0 %446
    %v448 = vsel %vm396, %v326, 0.0
    %449 = vadd.xlane.f32.xlu0 %v448
    %v450 = vpop.xlane.xlu0 %449
    %v451 = vsel %vm396, %v309, 0.0
    %452 = vadd.xlane.f32.xlu0 %v451
    %v453 = vpop.xlane.xlu0 %452
    %v454 = vsel %vm396, %v327, 0.0
    %455 = vadd.xlane.f32.xlu0 %v454
    %v456 = vpop.xlane.xlu0 %455
    %v457 = vsel %vm396, %v318, 0.0
    %458 = vadd.xlane.f32.xlu0 %v457
    %v459 = vpop.xlane.xlu0 %458
    %v460 = vsel %vm396, %v328, 0.0
    %461 = vadd.xlane.f32.xlu0 %v460
    %v462 = vpop.xlane.xlu0 %461
    %v463 = vsel %vm396, %v325, 0.0
    %464 = vadd.xlane.f32.xlu0 %v463
    %v465 = vpop.xlane.xlu0 %464
    %v466 = vsel %vm396, %v329, 0.0
    %467 = vadd.xlane.f32.xlu0 %v466
    %v468 = vpop.xlane.xlu0 %467
    %v469 = vsel %vm396, %v368, 0.0
    %470 = vadd.xlane.f32.xlu0 %v469
    %v471 = vpop.xlane.xlu0 %470
    %v472 = vsel %vm396, %v392, 0.0
    %473 = vadd.xlane.f32.xlu0 %v472
    %v474 = vpop.xlane.xlu0 %473
    %v475 = vsel %vm396, %v375, 0.0
    %476 = vadd.xlane.f32.xlu0 %v475
    %v477 = vpop.xlane.xlu0 %476
    %v478 = vsel %vm396, %v393, 0.0
    %479 = vadd.xlane.f32.xlu0 %v478
    %v480 = vpop.xlane.xlu0 %479
    %v481 = vsel %vm396, %v384, 0.0
    %482 = vadd.xlane.f32.xlu0 %v481
    %v483 = vpop.xlane.xlu0 %482
    %v484 = vsel %vm396, %v394, 0.0
    %485 = vadd.xlane.f32.xlu0 %v484
    %v486 = vpop.xlane.xlu0 %485
    %v487 = vsel %vm396, %v391, 0.0
    %488 = vadd.xlane.f32.xlu0 %v487
    %v489 = vpop.xlane.xlu0 %488
    %v490 = vsel %vm396, %v395, 0.0
    %491 = vadd.xlane.f32.xlu0 %v490
    %v492 = vpop.xlane.xlu0 %491
    %v493 = vrcp.pop 128.0
    %v494 = vmul.f32 %v399, %v493
    %v495 = vmul.f32 %v402, %v493
    %v496 = vmul.f32 %v405, %v493
    %v497 = vmul.f32 %v408, %v493
    %v498 = vmul.f32 %v411, %v493
    %v499 = vmul.f32 %v414, %v493
    %v500 = vmul.f32 %v417, %v493
    %v501 = vmul.f32 %v420, %v493
    %v502 = vmul.f32 %v423, %v493
    %v503 = vmul.f32 %v426, %v493
    %v504 = vmul.f32 %v429, %v493
    %v505 = vmul.f32 %v432, %v493
    %v506 = vmul.f32 %v435, %v493
    %v507 = vmul.f32 %v438, %v493
    %v508 = vmul.f32 %v441, %v493
    %v509 = vmul.f32 %v444, %v493
    %v510 = vmul.f32 %v447, %v493
    %v511 = vmul.f32 %v450, %v493
    %v512 = vmul.f32 %v453, %v493
    %v513 = vmul.f32 %v456, %v493
    %v514 = vmul.f32 %v459, %v493
    %v515 = vmul.f32 %v462, %v493
    %v516 = vmul.f32 %v465, %v493
    %v517 = vmul.f32 %v468, %v493
    %v518 = vmul.f32 %v471, %v493
    %v519 = vmul.f32 %v474, %v493
    %v520 = vmul.f32 %v477, %v493
    %v521 = vmul.f32 %v480, %v493
    %v522 = vmul.f32 %v483, %v493
    %v523 = vmul.f32 %v486, %v493
    %v524 = vmul.f32 %v489, %v493
    %v525 = vmul.f32 %v492, %v493
    %v526 = vmul.f32 %v170, %v170
    %v527 = vmul.f32 %v194, %v194
    %v528 = vmul.f32 %v177, %v177
    %v529 = vmul.f32 %v195, %v195
    %v530 = vmul.f32 %v186, %v186
    %v531 = vmul.f32 %v196, %v196
    %v532 = vmul.f32 %v193, %v193
    %v533 = vmul.f32 %v197, %v197
    %v534 = vmul.f32 %v236, %v236
    %v535 = vmul.f32 %v260, %v260
    %v536 = vmul.f32 %v243, %v243
    %v537 = vmul.f32 %v261, %v261
    %v538 = vmul.f32 %v252, %v252
    %v539 = vmul.f32 %v262, %v262
    %v540 = vmul.f32 %v259, %v259
    %v541 = vmul.f32 %v263, %v263
    %v542 = vmul.f32 %v302, %v302
    %v543 = vmul.f32 %v326, %v326
    %v544 = vmul.f32 %v309, %v309
    %v545 = vmul.f32 %v327, %v327
    %v546 = vmul.f32 %v318, %v318
    %v547 = vmul.f32 %v328, %v328
    %v548 = vmul.f32 %v325, %v325
    %v549 = vmul.f32 %v329, %v329
    %v550 = vmul.f32 %v368, %v368
    %v551 = vmul.f32 %v392, %v392
    %v552 = vmul.f32 %v375, %v375
    %v553 = vmul.f32 %v393, %v393
    %v554 = vmul.f32 %v384, %v384
    %v555 = vmul.f32 %v394, %v394
    %v556 = vmul.f32 %v391, %v391
    %v557 = vmul.f32 %v395, %v395
    %v558 = vsel %vm396, %v526, 0.0
    %559 = vadd.xlane.f32.xlu0 %v558
    %v560 = vpop.xlane.xlu0 %559
    %v561 = vsel %vm396, %v527, 0.0
    %562 = vadd.xlane.f32.xlu0 %v561
    %v563 = vpop.xlane.xlu0 %562
    %v564 = vsel %vm396, %v528, 0.0
    %565 = vadd.xlane.f32.xlu0 %v564
    %v566 = vpop.xlane.xlu0 %565
    %v567 = vsel %vm396, %v529, 0.0
    %568 = vadd.xlane.f32.xlu0 %v567
    %v569 = vpop.xlane.xlu0 %568
    %v570 = vsel %vm396, %v530, 0.0
    %571 = vadd.xlane.f32.xlu0 %v570
    %v572 = vpop.xlane.xlu0 %571
    %v573 = vsel %vm396, %v531, 0.0
    %574 = vadd.xlane.f32.xlu0 %v573
    %v575 = vpop.xlane.xlu0 %574
    %v576 = vsel %vm396, %v532, 0.0
    %577 = vadd.xlane.f32.xlu0 %v576
    %v578 = vpop.xlane.xlu0 %577
    %v579 = vsel %vm396, %v533, 0.0
    %580 = vadd.xlane.f32.xlu0 %v579
    %v581 = vpop.xlane.xlu0 %580
    %v582 = vsel %vm396, %v534, 0.0
    %583 = vadd.xlane.f32.xlu0 %v582
    %v584 = vpop.xlane.xlu0 %583
    %v585 = vsel %vm396, %v535, 0.0
    %586 = vadd.xlane.f32.xlu0 %v585
    %v587 = vpop.xlane.xlu0 %586
    %v588 = vsel %vm396, %v536, 0.0
    %589 = vadd.xlane.f32.xlu0 %v588
    %v590 = vpop.xlane.xlu0 %589
    %v591 = vsel %vm396, %v537, 0.0
    %592 = vadd.xlane.f32.xlu0 %v591
    %v593 = vpop.xlane.xlu0 %592
    %v594 = vsel %vm396, %v538, 0.0
    %595 = vadd.xlane.f32.xlu0 %v594
    %v596 = vpop.xlane.xlu0 %595
    %v597 = vsel %vm396, %v539, 0.0
    %598 = vadd.xlane.f32.xlu0 %v597
    %v599 = vpop.xlane.xlu0 %598
    %v600 = vsel %vm396, %v540, 0.0
    %601 = vadd.xlane.f32.xlu0 %v600
    %v602 = vpop.xlane.xlu0 %601
    %v603 = vsel %vm396, %v541, 0.0
    %604 = vadd.xlane.f32.xlu0 %v603
    %v605 = vpop.xlane.xlu0 %604
    %v606 = vsel %vm396, %v542, 0.0
    %607 = vadd.xlane.f32.xlu0 %v606
    %v608 = vpop.xlane.xlu0 %607
    %v609 = vsel %vm396, %v543, 0.0
    %610 = vadd.xlane.f32.xlu0 %v609
    %v611 = vpop.xlane.xlu0 %610
    %v612 = vsel %vm396, %v544, 0.0
    %613 = vadd.xlane.f32.xlu0 %v612
    %v614 = vpop.xlane.xlu0 %613
    %v615 = vsel %vm396, %v545, 0.0
    %616 = vadd.xlane.f32.xlu0 %v615
    %v617 = vpop.xlane.xlu0 %616
    %v618 = vsel %vm396, %v546, 0.0
    %619 = vadd.xlane.f32.xlu0 %v618
    %v620 = vpop.xlane.xlu0 %619
    %v621 = vsel %vm396, %v547, 0.0
    %622 = vadd.xlane.f32.xlu0 %v621
    %v623 = vpop.xlane.xlu0 %622
    %v624 = vsel %vm396, %v548, 0.0
    %625 = vadd.xlane.f32.xlu0 %v624
    %v626 = vpop.xlane.xlu0 %625
    %v627 = vsel %vm396, %v549, 0.0
    %628 = vadd.xlane.f32.xlu0 %v627
    %v629 = vpop.xlane.xlu0 %628
    %v630 = vsel %vm396, %v550, 0.0
    %631 = vadd.xlane.f32.xlu0 %v630
    %v632 = vpop.xlane.xlu0 %631
    %v633 = vsel %vm396, %v551, 0.0
    %634 = vadd.xlane.f32.xlu0 %v633
    %v635 = vpop.xlane.xlu0 %634
    %v636 = vsel %vm396, %v552, 0.0
    %637 = vadd.xlane.f32.xlu0 %v636
    %v638 = vpop.xlane.xlu0 %637
    %v639 = vsel %vm396, %v553, 0.0
    %640 = vadd.xlane.f32.xlu0 %v639
    %v641 = vpop.xlane.xlu0 %640
    %v642 = vsel %vm396, %v554, 0.0
    %643 = vadd.xlane.f32.xlu0 %v642
    %v644 = vpop.xlane.xlu0 %643
    %v645 = vsel %vm396, %v555, 0.0
    %646 = vadd.xlane.f32.xlu0 %v645
    %v647 = vpop.xlane.xlu0 %646
    %v648 = vsel %vm396, %v556, 0.0
    %649 = vadd.xlane.f32.xlu0 %v648
    %v650 = vpop.xlane.xlu0 %649
    %v651 = vsel %vm396, %v557, 0.0
    %652 = vadd.xlane.f32.xlu0 %v651
    %v653 = vpop.xlane.xlu0 %652
    %v654 = vmul.f32 %v560, %v493
    %v655 = vmul.f32 %v563, %v493
    %v656 = vmul.f32 %v566, %v493
    %v657 = vmul.f32 %v569, %v493
    %v658 = vmul.f32 %v572, %v493
    %v659 = vmul.f32 %v575, %v493
    %v660 = vmul.f32 %v578, %v493
    %v661 = vmul.f32 %v581, %v493
    %v662 = vmul.f32 %v584, %v493
    %v663 = vmul.f32 %v587, %v493
    %v664 = vmul.f32 %v590, %v493
    %v665 = vmul.f32 %v593, %v493
    %v666 = vmul.f32 %v596, %v493
    %v667 = vmul.f32 %v599, %v493
    %v668 = vmul.f32 %v602, %v493
    %v669 = vmul.f32 %v605, %v493
    %v670 = vmul.f32 %v608, %v493
    %v671 = vmul.f32 %v611, %v493
    %v672 = vmul.f32 %v614, %v493
    %v673 = vmul.f32 %v617, %v493
    %v674 = vmul.f32 %v620, %v493
    %v675 = vmul.f32 %v623, %v493
    %v676 = vmul.f32 %v626, %v493
    %v677 = vmul.f32 %v629, %v493
    %v678 = vmul.f32 %v632, %v493
    %v679 = vmul.f32 %v635, %v493
    %v680 = vmul.f32 %v638, %v493
    %v681 = vmul.f32 %v641, %v493
    %v682 = vmul.f32 %v644, %v493
    %v683 = vmul.f32 %v647, %v493
    %v684 = vmul.f32 %v650, %v493
    %v685 = vmul.f32 %v653, %v493
    %v686 = vmul.f32 %v494, %v494
    %v687 = vmul.f32 %v495, %v495
    %v688 = vmul.f32 %v496, %v496
    %v689 = vmul.f32 %v497, %v497
    %v690 = vmul.f32 %v498, %v498
    %v691 = vmul.f32 %v499, %v499
    %v692 = vmul.f32 %v500, %v500
    %v693 = vmul.f32 %v501, %v501
    %v694 = vmul.f32 %v502, %v502
    %v695 = vmul.f32 %v503, %v503
    %v696 = vmul.f32 %v504, %v504
    %v697 = vmul.f32 %v505, %v505
    %v698 = vmul.f32 %v506, %v506
    %v699 = vmul.f32 %v507, %v507
    %v700 = vmul.f32 %v508, %v508
    %v701 = vmul.f32 %v509, %v509
    %v702 = vmul.f32 %v510, %v510
    %v703 = vmul.f32 %v511, %v511
    %v704 = vmul.f32 %v512, %v512
    %v705 = vmul.f32 %v513, %v513
    %v706 = vmul.f32 %v514, %v514
    %v707 = vmul.f32 %v515, %v515
    %v708 = vmul.f32 %v516, %v516
    %v709 = vmul.f32 %v517, %v517
    %v710 = vmul.f32 %v518, %v518
    %v711 = vmul.f32 %v519, %v519
    %v712 = vmul.f32 %v520, %v520
    %v713 = vmul.f32 %v521, %v521
    %v714 = vmul.f32 %v522, %v522
    %v715 = vmul.f32 %v523, %v523
    %v716 = vmul.f32 %v524, %v524
    %v717 = vmul.f32 %v525, %v525
    %v718 = vsub.f32 %v654, %v686
    %v719 = vsub.f32 %v655, %v687
    %v720 = vsub.f32 %v656, %v688
    %v721 = vsub.f32 %v657, %v689
    %v722 = vsub.f32 %v658, %v690
    %v723 = vsub.f32 %v659, %v691
    %v724 = vsub.f32 %v660, %v692
    %v725 = vsub.f32 %v661, %v693
    %v726 = vsub.f32 %v662, %v694
    %v727 = vsub.f32 %v663, %v695
    %v728 = vsub.f32 %v664, %v696
    %v729 = vsub.f32 %v665, %v697
    %v730 = vsub.f32 %v666, %v698
    %v731 = vsub.f32 %v667, %v699
    %v732 = vsub.f32 %v668, %v700
    %v733 = vsub.f32 %v669, %v701
    %v734 = vsub.f32 %v670, %v702
    %v735 = vsub.f32 %v671, %v703
    %v736 = vsub.f32 %v672, %v704
    %v737 = vsub.f32 %v673, %v705
    %v738 = vsub.f32 %v674, %v706
    %v739 = vsub.f32 %v675, %v707
    %v740 = vsub.f32 %v676, %v708
    %v741 = vsub.f32 %v677, %v709
    %v742 = vsub.f32 %v678, %v710
    %v743 = vsub.f32 %v679, %v711
    %v744 = vsub.f32 %v680, %v712
    %v745 = vsub.f32 %v681, %v713
    %v746 = vsub.f32 %v682, %v714
    %v747 = vsub.f32 %v683, %v715
    %v748 = vsub.f32 %v684, %v716
    %v749 = vsub.f32 %v685, %v717
    %v750 = vmax.f32 %v718, 0.0
    %v751 = vmax.f32 %v719, 0.0
    %v752 = vmax.f32 %v720, 0.0
    %v753 = vmax.f32 %v721, 0.0
    %v754 = vmax.f32 %v722, 0.0
    %v755 = vmax.f32 %v723, 0.0
    %v756 = vmax.f32 %v724, 0.0
    %v757 = vmax.f32 %v725, 0.0
    %v758 = vmax.f32 %v726, 0.0
    %v759 = vmax.f32 %v727, 0.0
    %v760 = vmax.f32 %v728, 0.0
    %v761 = vmax.f32 %v729, 0.0
    %v762 = vmax.f32 %v730, 0.0
    %v763 = vmax.f32 %v731, 0.0
    %v764 = vmax.f32 %v732, 0.0
    %v765 = vmax.f32 %v733, 0.0
    %v766 = vmax.f32 %v734, 0.0
    %v767 = vmax.f32 %v735, 0.0
    %v768 = vmax.f32 %v736, 0.0
    %v769 = vmax.f32 %v737, 0.0
    %v770 = vmax.f32 %v738, 0.0
    %v771 = vmax.f32 %v739, 0.0
    %v772 = vmax.f32 %v740, 0.0
    %v773 = vmax.f32 %v741, 0.0
    %v774 = vmax.f32 %v742, 0.0
    %v775 = vmax.f32 %v743, 0.0
    %v776 = vmax.f32 %v744, 0.0
    %v777 = vmax.f32 %v745, 0.0
    %v778 = vmax.f32 %v746, 0.0
    %v779 = vmax.f32 %v747, 0.0
    %v780 = vmax.f32 %v748, 0.0
    %v781 = vmax.f32 %v749, 0.0
    %v782 = vsub.f32 %v170, %v494
    %v783 = vsub.f32 %v194, %v495
    %v784 = vsub.f32 %v177, %v496
    %v785 = vsub.f32 %v195, %v497
    %v786 = vsub.f32 %v186, %v498
    %v787 = vsub.f32 %v196, %v499
    %v788 = vsub.f32 %v193, %v500
    %v789 = vsub.f32 %v197, %v501
    %v790 = vsub.f32 %v236, %v502
    %v791 = vsub.f32 %v260, %v503
    %v792 = vsub.f32 %v243, %v504
    %v793 = vsub.f32 %v261, %v505
    %v794 = vsub.f32 %v252, %v506
    %v795 = vsub.f32 %v262, %v507
    %v796 = vsub.f32 %v259, %v508
    %v797 = vsub.f32 %v263, %v509
    %v798 = vsub.f32 %v302, %v510
    %v799 = vsub.f32 %v326, %v511
    %v800 = vsub.f32 %v309, %v512
    %v801 = vsub.f32 %v327, %v513
    %v802 = vsub.f32 %v318, %v514
    %v803 = vsub.f32 %v328, %v515
    %v804 = vsub.f32 %v325, %v516
    %v805 = vsub.f32 %v329, %v517
    %v806 = vsub.f32 %v368, %v518
    %v807 = vsub.f32 %v392, %v519
    %v808 = vsub.f32 %v375, %v520
    %v809 = vsub.f32 %v393, %v521
    %v810 = vsub.f32 %v384, %v522
    %v811 = vsub.f32 %v394, %v523
    %v812 = vsub.f32 %v391, %v524
    %v813 = vsub.f32 %v395, %v525
    %v814 = vadd.f32 %v750, 1e-05
    %v815 = vadd.f32 %v751, 1e-05
    %v816 = vadd.f32 %v752, 1e-05
    %v817 = vadd.f32 %v753, 1e-05
    %v818 = vadd.f32 %v754, 1e-05
    %v819 = vadd.f32 %v755, 1e-05
    %v820 = vadd.f32 %v756, 1e-05
    %v821 = vadd.f32 %v757, 1e-05
    %v822 = vadd.f32 %v758, 1e-05
    %v823 = vadd.f32 %v759, 1e-05
    %v824 = vadd.f32 %v760, 1e-05
    %v825 = vadd.f32 %v761, 1e-05
    %v826 = vadd.f32 %v762, 1e-05
    %v827 = vadd.f32 %v763, 1e-05
    %v828 = vadd.f32 %v764, 1e-05
    %v829 = vadd.f32 %v765, 1e-05
    %v830 = vadd.f32 %v766, 1e-05
    %v831 = vadd.f32 %v767, 1e-05
    %v832 = vadd.f32 %v768, 1e-05
    %v833 = vadd.f32 %v769, 1e-05
    %v834 = vadd.f32 %v770, 1e-05
    %v835 = vadd.f32 %v771, 1e-05
    %v836 = vadd.f32 %v772, 1e-05
    %v837 = vadd.f32 %v773, 1e-05
    %v838 = vadd.f32 %v774, 1e-05
    %v839 = vadd.f32 %v775, 1e-05
    %v840 = vadd.f32 %v776, 1e-05
    %v841 = vadd.f32 %v777, 1e-05
    %v842 = vadd.f32 %v778, 1e-05
    %v843 = vadd.f32 %v779, 1e-05
    %v844 = vadd.f32 %v780, 1e-05
    %v845 = vadd.f32 %v781, 1e-05
    %v846 = vrsqrt.pop %v814
    %v847 = vrsqrt.pop %v815
    %v848 = vrsqrt.pop %v816
    %v849 = vrsqrt.pop %v817
    %v850 = vrsqrt.pop %v818
    %v851 = vrsqrt.pop %v819
    %v852 = vrsqrt.pop %v820
    %v853 = vrsqrt.pop %v821
    %v854 = vrsqrt.pop %v822
    %v855 = vrsqrt.pop %v823
    %v856 = vrsqrt.pop %v824
    %v857 = vrsqrt.pop %v825
    %v858 = vrsqrt.pop %v826
    %v859 = vrsqrt.pop %v827
    %v860 = vrsqrt.pop %v828
    %v861 = vrsqrt.pop %v829
    %v862 = vrsqrt.pop %v830
    %v863 = vrsqrt.pop %v831
    %v864 = vrsqrt.pop %v832
    %v865 = vrsqrt.pop %v833
    %v866 = vrsqrt.pop %v834
    %v867 = vrsqrt.pop %v835
    %v868 = vrsqrt.pop %v836
    %v869 = vrsqrt.pop %v837
    %v870 = vrsqrt.pop %v838
    %v871 = vrsqrt.pop %v839
    %v872 = vrsqrt.pop %v840
    %v873 = vrsqrt.pop %v841
    %v874 = vrsqrt.pop %v842
    %v875 = vrsqrt.pop %v843
    %v876 = vrsqrt.pop %v844
    %v877 = vrsqrt.pop %v845
    %v878 = vmul.f32 %v782, %v846
    %v879 = vmul.f32 %v783, %v847
    %v880 = vmul.f32 %v784, %v848
    %v881 = vmul.f32 %v785, %v849
    %v882 = vmul.f32 %v786, %v850
    %v883 = vmul.f32 %v787, %v851
    %v884 = vmul.f32 %v788, %v852
    %v885 = vmul.f32 %v789, %v853
    %v886 = vmul.f32 %v790, %v854
    %v887 = vmul.f32 %v791, %v855
    %v888 = vmul.f32 %v792, %v856
    %v889 = vmul.f32 %v793, %v857
    %v890 = vmul.f32 %v794, %v858
    %v891 = vmul.f32 %v795, %v859
    %v892 = vmul.f32 %v796, %v860
    %v893 = vmul.f32 %v797, %v861
    %v894 = vmul.f32 %v798, %v862
    %v895 = vmul.f32 %v799, %v863
    %v896 = vmul.f32 %v800, %v864
    %v897 = vmul.f32 %v801, %v865
    %v898 = vmul.f32 %v802, %v866
    %v899 = vmul.f32 %v803, %v867
    %v900 = vmul.f32 %v804, %v868
    %v901 = vmul.f32 %v805, %v869
    %v902 = vmul.f32 %v806, %v870
    %v903 = vmul.f32 %v807, %v871
    %v904 = vmul.f32 %v808, %v872
    %v905 = vmul.f32 %v809, %v873
    %v906 = vmul.f32 %v810, %v874
    %v907 = vmul.f32 %v811, %v875
    %v908 = vmul.f32 %v812, %v876
    %v909 = vmul.f32 %v813, %v877
    %v910 = vcombine.low %v878, %v880
    %v912 = vunpack.c.l.s4 1983009808
    %v913 = vunpack.c.0.s8 %v912
    %v914 = vlaneseq
    %v915 = vshrl.u32 %v914, 7
    %v916 = vsub.s32 %v913, %v915
    %v917 = vrot.slane %v910, %v916
    %v918 = vcombine.low %v879, %v881
    %v920 = vunpack.c.l.s4 1983009808
    %v921 = vunpack.c.0.s8 %v920
    %v922 = vlaneseq
    %v923 = vshrl.u32 %v922, 7
    %v924 = vsub.s32 %v921, %v923
    %v925 = vrot.slane %v918, %v924
    %v926 = vcombine.low %v882, %v884
    %v928 = vunpack.c.l.s4 1983009808
    %v929 = vunpack.c.0.s8 %v928
    %v930 = vlaneseq
    %v931 = vshrl.u32 %v930, 7
    %v932 = vsub.s32 %v929, %v931
    %v933 = vrot.slane %v926, %v932
    %v934 = vcombine.low %v883, %v885
    %v936 = vunpack.c.l.s4 1983009808
    %v937 = vunpack.c.0.s8 %v936
    %v938 = vlaneseq
    %v939 = vshrl.u32 %v938, 7
    %v940 = vsub.s32 %v937, %v939
    %v941 = vrot.slane %v934, %v940
    %v942 = vcombine.low %v917, %v925
    %v944 = vunpack.c.l.s4 1934713408
    %v945 = vunpack.c.0.s8 %v944
    %v946 = vlaneseq
    %v947 = vshrl.u32 %v946, 7
    %v948 = vsub.s32 %v945, %v947
    %v949 = vrot.slane %v942, %v948
    %v950 = vcombine.low %v933, %v941
    %v952 = vunpack.c.l.s4 1934713408
    %v953 = vunpack.c.0.s8 %v952
    %v954 = vlaneseq
    %v955 = vshrl.u32 %v954, 7
    %v956 = vsub.s32 %v953, %v955
    %v957 = vrot.slane %v950, %v956
    %v958 = vcombine.low %v949, %v957
    %v959 = vcombine.high %v949, %v957
    %v960 = vcombine.low %v886, %v888
    %v962 = vunpack.c.l.s4 1983009808
    %v963 = vunpack.c.0.s8 %v962
    %v964 = vlaneseq
    %v965 = vshrl.u32 %v964, 7
    %v966 = vsub.s32 %v963, %v965
    %v967 = vrot.slane %v960, %v966
    %v968 = vcombine.low %v887, %v889
    %v970 = vunpack.c.l.s4 1983009808
    %v971 = vunpack.c.0.s8 %v970
    %v972 = vlaneseq
    %v973 = vshrl.u32 %v972, 7
    %v974 = vsub.s32 %v971, %v973
    %v975 = vrot.slane %v968, %v974
    %v976 = vcombine.low %v890, %v892
    %v978 = vunpack.c.l.s4 1983009808
    %v979 = vunpack.c.0.s8 %v978
    %v980 = vlaneseq
    %v981 = vshrl.u32 %v980, 7
    %v982 = vsub.s32 %v979, %v981
    %v983 = vrot.slane %v976, %v982
    %v984 = vcombine.low %v891, %v893
    %v986 = vunpack.c.l.s4 1983009808
    %v987 = vunpack.c.0.s8 %v986
    %v988 = vlaneseq
    %v989 = vshrl.u32 %v988, 7
    %v990 = vsub.s32 %v987, %v989
    %v991 = vrot.slane %v984, %v990
    %v992 = vcombine.low %v967, %v975
    %v994 = vunpack.c.l.s4 1934713408
    %v995 = vunpack.c.0.s8 %v994
    %v996 = vlaneseq
    %v997 = vshrl.u32 %v996, 7
    %v998 = vsub.s32 %v995, %v997
    %v999 = vrot.slane %v992, %v998
    %v1000 = vcombine.low %v983, %v991
    %v1002 = vunpack.c.l.s4 1934713408
    %v1003 = vunpack.c.0.s8 %v1002
    %v1004 = vlaneseq
    %v1005 = vshrl.u32 %v1004, 7
    %v1006 = vsub.s32 %v1003, %v1005
    %v1007 = vrot.slane %v1000, %v1006
    %v1008 = vcombine.low %v999, %v1007
    %v1009 = vcombine.high %v999, %v1007
    %v1010 = vcombine.low %v894, %v896
    %v1012 = vunpack.c.l.s4 1983009808
    %v1013 = vunpack.c.0.s8 %v1012
    %v1014 = vlaneseq
    %v1015 = vshrl.u32 %v1014, 7
    %v1016 = vsub.s32 %v1013, %v1015
    %v1017 = vrot.slane %v1010, %v1016
    %v1018 = vcombine.low %v895, %v897
    %v1020 = vunpack.c.l.s4 1983009808
    %v1021 = vunpack.c.0.s8 %v1020
    %v1022 = vlaneseq
    %v1023 = vshrl.u32 %v1022, 7
    %v1024 = vsub.s32 %v1021, %v1023
    %v1025 = vrot.slane %v1018, %v1024
    %v1026 = vcombine.low %v898, %v900
    %v1028 = vunpack.c.l.s4 1983009808
    %v1029 = vunpack.c.0.s8 %v1028
    %v1030 = vlaneseq
    %v1031 = vshrl.u32 %v1030, 7
    %v1032 = vsub.s32 %v1029, %v1031
    %v1033 = vrot.slane %v1026, %v1032
    %v1034 = vcombine.low %v899, %v901
    %v1036 = vunpack.c.l.s4 1983009808
    %v1037 = vunpack.c.0.s8 %v1036
    %v1038 = vlaneseq
    %v1039 = vshrl.u32 %v1038, 7
    %v1040 = vsub.s32 %v1037, %v1039
    %v1041 = vrot.slane %v1034, %v1040
    %v1042 = vcombine.low %v1017, %v1025
    %v1044 = vunpack.c.l.s4 1934713408
    %v1045 = vunpack.c.0.s8 %v1044
    %v1046 = vlaneseq
    %v1047 = vshrl.u32 %v1046, 7
    %v1048 = vsub.s32 %v1045, %v1047
    %v1049 = vrot.slane %v1042, %v1048
    %v1050 = vcombine.low %v1033, %v1041
    %v1052 = vunpack.c.l.s4 1934713408
    %v1053 = vunpack.c.0.s8 %v1052
    %v1054 = vlaneseq
    %v1055 = vshrl.u32 %v1054, 7
    %v1056 = vsub.s32 %v1053, %v1055
    %v1057 = vrot.slane %v1050, %v1056
    %v1058 = vcombine.low %v1049, %v1057
    %v1059 = vcombine.high %v1049, %v1057
    %v1060 = vcombine.low %v902, %v904
    %v1062 = vunpack.c.l.s4 1983009808
    %v1063 = vunpack.c.0.s8 %v1062
    %v1064 = vlaneseq
    %v1065 = vshrl.u32 %v1064, 7
    %v1066 = vsub.s32 %v1063, %v1065
    %v1067 = vrot.slane %v1060, %v1066
    %v1068 = vcombine.low %v903, %v905
    %v1070 = vunpack.c.l.s4 1983009808
    %v1071 = vunpack.c.0.s8 %v1070
    %v1072 = vlaneseq
    %v1073 = vshrl.u32 %v1072, 7
    %v1074 = vsub.s32 %v1071, %v1073
    %v1075 = vrot.slane %v1068, %v1074
    %v1076 = vcombine.low %v906, %v908
    %v1078 = vunpack.c.l.s4 1983009808
    %v1079 = vunpack.c.0.s8 %v1078
    %v1080 = vlaneseq
    %v1081 = vshrl.u32 %v1080, 7
    %v1082 = vsub.s32 %v1079, %v1081
    %v1083 = vrot.slane %v1076, %v1082
    %v1084 = vcombine.low %v907, %v909
    %v1086 = vunpack.c.l.s4 1983009808
    %v1087 = vunpack.c.0.s8 %v1086
    %v1088 = vlaneseq
    %v1089 = vshrl.u32 %v1088, 7
    %v1090 = vsub.s32 %v1087, %v1089
    %v1091 = vrot.slane %v1084, %v1090
    %v1092 = vcombine.low %v1067, %v1075
    %v1094 = vunpack.c.l.s4 1934713408
    %v1095 = vunpack.c.0.s8 %v1094
    %v1096 = vlaneseq
    %v1097 = vshrl.u32 %v1096, 7
    %v1098 = vsub.s32 %v1095, %v1097
    %v1099 = vrot.slane %v1092, %v1098
    %v1100 = vcombine.low %v1083, %v1091
    %v1102 = vunpack.c.l.s4 1934713408
    %v1103 = vunpack.c.0.s8 %v1102
    %v1104 = vlaneseq
    %v1105 = vshrl.u32 %v1104, 7
    %v1106 = vsub.s32 %v1103, %v1105
    %v1107 = vrot.slane %v1100, %v1106
    %v1108 = vcombine.low %v1099, %v1107
    %v1109 = vcombine.high %v1099, %v1107
    %v1110 = vadd.f32 %v958, %v1058
    %v1111 = vadd.f32 %v959, %v1059
    %v1112 = vadd.f32 %v1008, %v1108
    %v1113 = vadd.f32 %v1009, %v1109
    %v1114 = vmax.f32 %v1110, 0.0
    %v1115 = vmax.f32 %v1111, 0.0
    %v1116 = vmax.f32 %v1112, 0.0
    %v1117 = vmax.f32 %v1113, 0.0
    %v1118 = vld [vmem:[%s1] sm:$0xff]
    %v1119 = vld [vmem:[%s1 + $0x8] sm:$0xff]
    %1121 = vset.pattern.permute.xlu0 0
    %1122 = vperm.xlu0 %1121, %v1118
    %v1123 = vpop.permute.xlu0 %1122
    %1126 = vset.pattern.permute.xlu0 0
    %1127 = vperm.xlu0 %1126, %v1119
    %v1128 = vpop.permute.xlu0 %1127
    %v1130 = vmul.f32 %v1123, %v1114
    %v1131 = vmul.f32 %v1123, %v1115
    %v1132 = vmul.f32 %v1128, %v1116
    %v1133 = vmul.f32 %v1128, %v1117
    %v1134 = vadd.f32 %v1130, %v1132
    %v1135 = vrot.slane %v1134, 4
    %v1136 = vadd.f32 %v1134, %v1135
    %v1137 = vrot.slane %v1136, 2
    %v1138 = vadd.f32 %v1136, %v1137
    %v1139 = vrot.slane %v1138, 1
    %v1140 = vadd.f32 %v1138, %v1139
    %v1141 = vadd.f32 %v1131, %v1133
    %v1142 = vrot.slane %v1141, 4
    %v1143 = vadd.f32 %v1141, %v1142
    %v1144 = vrot.slane %v1143, 2
    %v1145 = vadd.f32 %v1143, %v1144
    %v1146 = vrot.slane %v1145, 1
    %v1147 = vadd.f32 %v1145, %v1146
    %v1150 = vcombine.low %v1140, %v1147
    %v1152 = vunpack.c.l.s4 1966171168
    %v1153 = vunpack.c.0.s8 %v1152
    %v1154 = vlaneseq
    %v1155 = vshrl.u32 %v1154, 7
    %v1156 = vsub.s32 %v1153, %v1155
    %v1157 = vrot.slane %v1150, %v1156
    %v1159 = vunpack.c.l.s4 1966171168
    %v1160 = vunpack.c.0.s8 %v1159
    %v1161 = vlaneseq
    %v1162 = vshrl.u32 %v1161, 7
    %v1163 = vsub.s32 %v1160, %v1162
    %v1164 = vrot.slane %v1157, %v1163
    %v1166 = vsel %vm396, %v1164, 0.0
    %1167 = vadd.xlane.f32.xlu0 %v1166
    %v1168 = vpop.xlane.xlu0 %1167
    %v1169 = vmul.f32 %v1168, %v493
    %v1170 = vmul.f32 %v1164, %v1164
    %v1171 = vsel %vm396, %v1170, 0.0
    %1172 = vadd.xlane.f32.xlu0 %v1171
    %v1173 = vpop.xlane.xlu0 %1172
    %v1174 = vmul.f32 %v1173, %v493
    %v1175 = vmul.f32 %v1169, %v1169
    %v1176 = vsub.f32 %v1174, %v1175
    %v1177 = vmax.f32 %v1176, 0.0
    %v1178 = vsub.f32 %v1164, %v1169
    %v1179 = vadd.f32 %v1177, 1e-05
    %v1180 = vrsqrt.pop %v1179
    %v1181 = vmul.f32 %v1178, %v1180
    %v1183 = vunpack.c.l.s4 1934713408
    %v1184 = vunpack.c.0.s8 %v1183
    %v1185 = vlaneseq
    %v1186 = vshrl.u32 %v1185, 7
    %v1187 = vsub.s32 %v1184, %v1186
    %v1188 = vrot.slane %v1181, %v1187
    %v1189 = vcombine.high %v1188, 0.0
    %v1190 = vxor.u32 %v1188, 2147483648
    %v1191 = vxor.u32 %v1189, 2147483648
    %v1192 = vmul.f32 %v1190, 1.442695
    %v1193 = vpow.pop %v1192
    %v1194 = vmul.f32 %v1191, 1.442695
    %v1195 = vpow.pop %v1194
    %v1196 = vadd.f32 %v1193, 1.0
    %v1197 = vadd.f32 %v1195, 1.0
    %v1198 = vrcp.pop %v1196
    %v1199 = vmul.f32 1.0, %v1198
    %v1200 = vrcp.pop %v1197
    %v1201 = vmul.f32 1.0, %v1200
    %v1202 = vld [vmem:[%s2 + $0x10] sm:$0xf]
    %v1203 = vld [vmem:[%s2 + $0x18] sm:$0xf]
    %v1204 = vlaneseq
    %v1205 = vshrl.u32 %v1204, 7
    %v1206 = vsub.s32 0, %v1205
    %v1207 = vrot.slane %v1199, %v1206
    %v1208 = vlaneseq
    %v1209 = vshrl.u32 %v1208, 7
    %v1210 = vsub.s32 0, %v1209
    %v1211 = vrot.slane %v1201, %v1210
    %v1212 = vmul.f32 %v1202, %v1207
    %v1213 = vmul.f32 %v1203, %v1211
    %v1216 = vcombine.low %v1212, %v1213
    %1218 = vst [vmem:[#allocation2] sm:$0xff] %v1216
    // Predicated region
    $region14: #{tpu_custom_call.1} parent=1 // pred_check
      _
    $region15: #{tpu_custom_call.1} parent=1 // pred_check_branch
      %1220 = sbr.rel (0) target = $region17
    $region16: #{tpu_custom_call.1} parent=1 // pred_region
      %s1222 = ssub.s32 128, 128
      %1223 = vsyncadd [#allocation3], %s1222
      %s1225 = sshll.u32 [#allocation2], 4
      %s1226 = int_to_ptr.vmem [resolvable:$true] %s1225
      %1228 = dma.vmem_to_hbm [thread:$0]  %s1226, 128, %s3, [#allocation3]
    $region17: #{tpu_custom_call.1} parent=1 // pred_fallthru
      _
    // Predicated region
    $region18: #{tpu_custom_call.1} parent=1 // pred_check
      _
    $region19: #{tpu_custom_call.1} parent=1 // pred_check_branch
      %1230 = sbr.rel (0) target = $region21
    $region20: #{tpu_custom_call.1} parent=1 // pred_region
      %1231 = dma.done [#allocation3], 128
    $region21: #{tpu_custom_call.1} parent=1 // pred_fallthru
      _
    %1232 = vsyncpa [#allocation3], 1

</llo_original>
